<compile_context>
chip_gen: v6e
topology: v6e:2x2x1
jax: 0.10.0
libtpu: 0.0.40
codegen_flags: <defaults>
</compile_context>

<pallas_src>
import functools

import jax
import jax.numpy as jnp
from jax.experimental import pallas as pl
from jax.experimental.pallas import tpu as pltpu

LANE = 128     # vreg lane width
SUBLANE = 8    # vreg sublane height


def _round_up(v, m):
    return (v + m - 1) // m * m


def _choose_tm(batch):
    """Batch tile: big blocks; >=2 grid steps once the batch is large enough
    so v7x's second TensorCore can share the 'parallel' axis."""
    b8 = _round_up(batch, SUBLANE)
    if b8 > 512:
        return 256                                   # many 256-row parallel tiles
    if b8 >= 128:
        return _round_up((b8 + 1) // 2, SUBLANE)     # exactly 2 large blocks
    return b8                                        # small batch: single block


def fused_mlp_kernel(x_ref, *refs):
    """refs = (w1, b1, w2, b2, ..., wL, bL, o_ref).

    Computes h = relu(h @ W_i + b_i) for every layer, keeping h in vregs,
    and writes only the final (lane-dense, padded) activation.
    """
    o_ref = refs[-1]
    wb = refs[:-1]
    h = x_ref[...]
    for i in range(0, len(wb), 2):                   # unrolled at trace time
        w_ref, b_ref = wb[i], wb[i + 1]
        acc = jnp.dot(h.astype(w_ref.dtype), w_ref[...],
                      preferred_element_type=jnp.float32)
        h = jnp.maximum(acc + b_ref[...], 0.0)       # bias (1,N) broadcasts; VPU filler
    o_ref[...] = h.astype(o_ref.dtype)


def init_mlp_params(key, hpl):
    """PyTorch-matching params: weight (out, in) ~ N(0, 0.1),
    bias (out,) ~ U(-1/sqrt(in), 1/sqrt(in)) (nn.Linear default bias init)."""
    params = []
    for i in range(len(hpl) - 1):
        now, nxt = hpl[i], hpl[i + 1]
        key, kw, kb = jax.random.split(key, 3)
        w = 0.1 * jax.random.normal(kw, (nxt, now), dtype=jnp.float32)
        bound = 1.0 / jnp.sqrt(jnp.float32(now))
        b = jax.random.uniform(kb, (nxt,), dtype=jnp.float32,
                               minval=-bound, maxval=bound)
        params.append((w, b))
    return params


def prepare_params(params):
    """One-time prep: transpose (out,in)->(in,out), zero-pad, cast weights bf16.

    First-layer K is padded only to the 8 sublane grain; every layer's output
    dim is padded to 128 lanes, and the next layer's K is chained to match so
    intermediates stay lane-dense. Zero padding is semantics-preserving."""
    prepped = []
    k_pad = _round_up(params[0][0].shape[1], SUBLANE)
    for w, b in params:
        nout, nin = w.shape
        n_pad = _round_up(nout, LANE)
        w_t = jnp.zeros((k_pad, n_pad), jnp.float32).at[:nin, :nout].set(w.T)
        b_p = jnp.zeros((1, n_pad), jnp.float32).at[0, :nout].set(b)
        prepped.append((w_t.astype(jnp.bfloat16), b_p))
        k_pad = n_pad
    return prepped


@functools.partial(
    jax.jit, static_argnames=("out_dim", "dims", "single_buffer_weights"))
def mlp_forward(x, prepped, out_dim, dims, single_buffer_weights=True):
    """Fused forward pass. x: (B, K_in) f32; prepped from prepare_params.
    dims: true (unpadded) layer widths, e.g. (16, 32, 64, 8)."""
    B, K = x.shape
    k_pad0 = prepped[0][0].shape[0]
    n_out_pad = prepped[-1][0].shape[1]
    tm = _choose_tm(B)
    b_pad = _round_up(B, tm)

    # Pad only the batch (to the tile) and K to the 8-grain first-layer width.
    x_pad = jnp.zeros((b_pad, k_pad0), jnp.float32).at[:B, :K].set(
        x.astype(jnp.float32))

    # Weight/bias blocks: full-array, constant index_map -> fetched once;
    # single-buffer them to halve resident weight VMEM.
    wb_mode = pl.Buffered(1) if single_buffer_weights else None
    flat_inputs = []
    in_specs = [pl.BlockSpec((tm, k_pad0), lambda i: (i, 0))]
    for w_t, b_p in prepped:
        flat_inputs.extend([w_t, b_p])
        in_specs.append(pl.BlockSpec(w_t.shape, lambda i: (0, 0),
                                     pipeline_mode=wb_mode))
        in_specs.append(pl.BlockSpec(b_p.shape, lambda i: (0, 0),
                                     pipeline_mode=wb_mode))

    # Cost estimate from TRUE (unpadded) dims.
    n_layers = len(dims) - 1
    true_flops = 2 * B * sum(dims[i] * dims[i + 1] for i in range(n_layers))
    true_bytes = (B * K * 4
                  + sum(dims[i] * dims[i + 1] * 2 + dims[i + 1] * 4
                        for i in range(n_layers))
                  + B * out_dim * 4)

    # Explicit VMEM budget: x/out tiles double-buffered + resident weights.
    wb_bufs = 1 if single_buffer_weights else 2
    est_vmem = (2 * tm * k_pad0 * 4 + 2 * tm * n_out_pad * 4
                + wb_bufs * sum(w.size * w.dtype.itemsize
                                + b.size * b.dtype.itemsize
                                for w, b in prepped))
    vmem_limit = int(min(64 * 1024 * 1024, max(4 * 1024 * 1024, 2 * est_vmem)))

    out_pad = pl.pallas_call(
        fused_mlp_kernel,
        out_shape=jax.ShapeDtypeStruct((b_pad, n_out_pad), jnp.float32),
        grid=(b_pad // tm,),
        in_specs=in_specs,
        out_specs=pl.BlockSpec((tm, n_out_pad), lambda i: (i, 0)),
        compiler_params=pltpu.CompilerParams(
            dimension_semantics=("parallel",),
            vmem_limit_bytes=vmem_limit),
        cost_estimate=pl.CostEstimate(
            flops=true_flops, transcendentals=0, bytes_accessed=true_bytes),
    )(x_pad, *flat_inputs)

    # Slice away batch + lane padding: true output is (B, out_dim).
    return out_pad[:B, :out_dim]


if __name__ == "__main__":
    # TODO(synk): update()/MSELoss optimizer step (training) is out of scope;
    # forward pass only.
    hpl = [16, 32, 64, 8]      # hyper_parameter['list']
    batch = 4

    key = jax.random.PRNGKey(0)
    key, kx = jax.random.split(key)
    x = jax.random.normal(kx, (batch, hpl[0]), dtype=jnp.float32)

    params = init_mlp_params(key, hpl)          # PyTorch-layout params
    prepped = prepare_params(params)            # one-time transpose + pad + bf16

    try:
        out = mlp_forward(x, prepped, out_dim=hpl[-1], dims=tuple(hpl),
                          single_buffer_weights=True)
        out = jax.block_until_ready(out)
    except Exception:
        # pl.Buffered(1) not accepted by this jax build: fall back to the
        # default double-buffered weight blocks (identical math).
        out = mlp_forward(x, prepped, out_dim=hpl[-1], dims=tuple(hpl),
                          single_buffer_weights=False)
        out = jax.block_until_ready(out)

    # Pure-JAX f32 reference (same math, no Pallas). bf16 weights/activations
    # inside the kernel => looser tolerance than a pure-f32 comparison.
    ref = x
    for w, b in params:
        ref = jnp.maximum(ref @ w.T + b, 0.0)

    assert out.shape == (batch, hpl[-1])
    assert jnp.allclose(out, ref, atol=2e-2, rtol=2e-2), (
        float(jnp.max(jnp.abs(out - ref))))

    print("KERNEL_OK")
</pallas_src>

<mosaic_0001>
module attributes {stable_mosaic.version = 11 : i64} {
  func.func @fused_mlp_kernel(%arg0: i32, %arg1: memref<8x16xf32, #tpu.memory_space<vmem>>, %arg2: memref<16x128xbf16, #tpu.memory_space<vmem>>, %arg3: memref<1x128xf32, #tpu.memory_space<vmem>>, %arg4: memref<128x128xbf16, #tpu.memory_space<vmem>>, %arg5: memref<1x128xf32, #tpu.memory_space<vmem>>, %arg6: memref<128x128xbf16, #tpu.memory_space<vmem>>, %arg7: memref<1x128xf32, #tpu.memory_space<vmem>>, %arg8: memref<8x128xf32, #tpu.memory_space<vmem>>) attributes {dimension_semantics = [#tpu.dimension_semantics<parallel>], iteration_bounds = array<i64: 1>, scalar_prefetch = 0 : i64, scratch_operands = 0 : i64, tpu.core_type = #tpu.core_type<tc>, window_params = [{transform_indices = @transform_0, window_bounds = array<i64: 8, 16>}, {pipeline_mode = #tpu.pipeline_mode<synchronous>, transform_indices = @transform_1, window_bounds = array<i64: 16, 128>}, {pipeline_mode = #tpu.pipeline_mode<synchronous>, transform_indices = @transform_2, window_bounds = array<i64: 1, 128>}, {pipeline_mode = #tpu.pipeline_mode<synchronous>, transform_indices = @transform_3, window_bounds = array<i64: 128, 128>}, {pipeline_mode = #tpu.pipeline_mode<synchronous>, transform_indices = @transform_4, window_bounds = array<i64: 1, 128>}, {pipeline_mode = #tpu.pipeline_mode<synchronous>, transform_indices = @transform_5, window_bounds = array<i64: 128, 128>}, {pipeline_mode = #tpu.pipeline_mode<synchronous>, transform_indices = @transform_6, window_bounds = array<i64: 1, 128>}, {transform_indices = @transform_7, window_bounds = array<i64: 8, 128>}]} {
    %c0 = arith.constant 0 : index
    %c0_0 = arith.constant 0 : index
    %0 = vector.load %arg1[%c0, %c0_0] : memref<8x16xf32, #tpu.memory_space<vmem>>, vector<8x16xf32>
    %1 = arith.truncf %0 : vector<8x16xf32> to vector<8x16xbf16>
    %c0_1 = arith.constant 0 : index
    %c0_2 = arith.constant 0 : index
    %2 = vector.load %arg2[%c0_1, %c0_2] : memref<16x128xbf16, #tpu.memory_space<vmem>>, vector<16x128xbf16>
    %cst = arith.constant dense<0.000000e+00> : vector<8x128xf32>
    %3 = tpu.matmul %1, %2, %cst {dimension_numbers = #tpu.dot_dimension_numbers<[1], [0], [0], [1], [0, 0, 1, 1], [], []>} : vector<8x16xbf16>, vector<16x128xbf16>, vector<8x128xf32> -> vector<8x128xf32>
    %c0_3 = arith.constant 0 : index
    %c0_4 = arith.constant 0 : index
    %4 = vector.load %arg3[%c0_3, %c0_4] : memref<1x128xf32, #tpu.memory_space<vmem>>, vector<1x128xf32>
    %5 = vector.broadcast %4 : vector<1x128xf32> to vector<8x128xf32>
    %6 = arith.addf %3, %5 : vector<8x128xf32>
    %cst_5 = arith.constant 0.000000e+00 : f32
    %7 = vector.broadcast %cst_5 : f32 to vector<8x128xf32>
    %8 = arith.maximumf %6, %7 : vector<8x128xf32>
    %9 = arith.truncf %8 : vector<8x128xf32> to vector<8x128xbf16>
    %c0_6 = arith.constant 0 : index
    %c0_7 = arith.constant 0 : index
    %10 = vector.load %arg4[%c0_6, %c0_7] : memref<128x128xbf16, #tpu.memory_space<vmem>>, vector<128x128xbf16>
    %cst_8 = arith.constant dense<0.000000e+00> : vector<8x128xf32>
    %11 = tpu.matmul %9, %10, %cst_8 {dimension_numbers = #tpu.dot_dimension_numbers<[1], [0], [0], [1], [0, 0, 1, 1], [], []>} : vector<8x128xbf16>, vector<128x128xbf16>, vector<8x128xf32> -> vector<8x128xf32>
    %c0_9 = arith.constant 0 : index
    %c0_10 = arith.constant 0 : index
    %12 = vector.load %arg5[%c0_9, %c0_10] : memref<1x128xf32, #tpu.memory_space<vmem>>, vector<1x128xf32>
    %13 = vector.broadcast %12 : vector<1x128xf32> to vector<8x128xf32>
    %14 = arith.addf %11, %13 : vector<8x128xf32>
    %cst_11 = arith.constant 0.000000e+00 : f32
    %15 = vector.broadcast %cst_11 : f32 to vector<8x128xf32>
    %16 = arith.maximumf %14, %15 : vector<8x128xf32>
    %17 = arith.truncf %16 : vector<8x128xf32> to vector<8x128xbf16>
    %c0_12 = arith.constant 0 : index
    %c0_13 = arith.constant 0 : index
    %18 = vector.load %arg6[%c0_12, %c0_13] : memref<128x128xbf16, #tpu.memory_space<vmem>>, vector<128x128xbf16>
    %cst_14 = arith.constant dense<0.000000e+00> : vector<8x128xf32>
    %19 = tpu.matmul %17, %18, %cst_14 {dimension_numbers = #tpu.dot_dimension_numbers<[1], [0], [0], [1], [0, 0, 1, 1], [], []>} : vector<8x128xbf16>, vector<128x128xbf16>, vector<8x128xf32> -> vector<8x128xf32>
    %c0_15 = arith.constant 0 : index
    %c0_16 = arith.constant 0 : index
    %20 = vector.load %arg7[%c0_15, %c0_16] : memref<1x128xf32, #tpu.memory_space<vmem>>, vector<1x128xf32>
    %21 = vector.broadcast %20 : vector<1x128xf32> to vector<8x128xf32>
    %22 = arith.addf %19, %21 : vector<8x128xf32>
    %cst_17 = arith.constant 0.000000e+00 : f32
    %23 = vector.broadcast %cst_17 : f32 to vector<8x128xf32>
    %24 = arith.maximumf %22, %23 : vector<8x128xf32>
    %c0_18 = arith.constant 0 : index
    %c0_19 = arith.constant 0 : index
    %25 = vector.load %arg8[%c0_18, %c0_19] : memref<8x128xf32, #tpu.memory_space<vmem>>, vector<8x128xf32>
    tpu.vector_store %arg8[%c0_18, %c0_19], %24 {strides = array<i32>} : memref<8x128xf32, #tpu.memory_space<vmem>>, vector<8x128xf32>,
    return
  }
  func.func @transform_0(%arg0: i32) -> (i32, i32) {
    %c0_i32 = arith.constant 0 : i32
    %c0_i32_0 = arith.constant 0 : i32
    return %arg0, %c0_i32 : i32, i32
  }
  func.func @transform_1(%arg0: i32) -> (i32, i32) {
    %c0_i32 = arith.constant 0 : i32
    %c0_i32_0 = arith.constant 0 : i32
    %c0_i32_1 = arith.constant 0 : i32
    return %c0_i32, %c0_i32_0 : i32, i32
  }
  func.func @transform_2(%arg0: i32) -> (i32, i32) {
    %c0_i32 = arith.constant 0 : i32
    %c0_i32_0 = arith.constant 0 : i32
    %c0_i32_1 = arith.constant 0 : i32
    return %c0_i32, %c0_i32_0 : i32, i32
  }
  func.func @transform_3(%arg0: i32) -> (i32, i32) {
    %c0_i32 = arith.constant 0 : i32
    %c0_i32_0 = arith.constant 0 : i32
    %c0_i32_1 = arith.constant 0 : i32
    return %c0_i32, %c0_i32_0 : i32, i32
  }
  func.func @transform_4(%arg0: i32) -> (i32, i32) {
    %c0_i32 = arith.constant 0 : i32
    %c0_i32_0 = arith.constant 0 : i32
    %c0_i32_1 = arith.constant 0 : i32
    return %c0_i32, %c0_i32_0 : i32, i32
  }
  func.func @transform_5(%arg0: i32) -> (i32, i32) {
    %c0_i32 = arith.constant 0 : i32
    %c0_i32_0 = arith.constant 0 : i32
    %c0_i32_1 = arith.constant 0 : i32
    return %c0_i32, %c0_i32_0 : i32, i32
  }
  func.func @transform_6(%arg0: i32) -> (i32, i32) {
    %c0_i32 = arith.constant 0 : i32
    %c0_i32_0 = arith.constant 0 : i32
    %c0_i32_1 = arith.constant 0 : i32
    return %c0_i32, %c0_i32_0 : i32, i32
  }
  func.func @transform_7(%arg0: i32) -> (i32, i32) {
    %c0_i32 = arith.constant 0 : i32
    %c0_i32_0 = arith.constant 0 : i32
    return %arg0, %c0_i32 : i32, i32
  }
}

module attributes {stable_mosaic.version = 11 : i64} {
  func.func @fused_mlp_kernel(%arg0: i32, %arg1: memref<8x16xf32, #tpu.memory_space<vmem>>, %arg2: memref<16x128xbf16, #tpu.memory_space<vmem>>, %arg3: memref<1x128xf32, #tpu.memory_space<vmem>>, %arg4: memref<128x128xbf16, #tpu.memory_space<vmem>>, %arg5: memref<1x128xf32, #tpu.memory_space<vmem>>, %arg6: memref<128x128xbf16, #tpu.memory_space<vmem>>, %arg7: memref<1x128xf32, #tpu.memory_space<vmem>>, %arg8: memref<8x128xf32, #tpu.memory_space<vmem>>) attributes {dimension_semantics = [#tpu.dimension_semantics<parallel>], iteration_bounds = array<i64: 1>, scalar_prefetch = 0 : i64, scratch_operands = 0 : i64, tpu.core_type = #tpu.core_type<tc>, window_params = [{transform_indices = @transform_0, window_bounds = array<i64: 8, 16>}, {pipeline_mode = #tpu.pipeline_mode<synchronous>, transform_indices = @transform_1, window_bounds = array<i64: 16, 128>}, {pipeline_mode = #tpu.pipeline_mode<synchronous>, transform_indices = @transform_2, window_bounds = array<i64: 1, 128>}, {pipeline_mode = #tpu.pipeline_mode<synchronous>, transform_indices = @transform_3, window_bounds = array<i64: 128, 128>}, {pipeline_mode = #tpu.pipeline_mode<synchronous>, transform_indices = @transform_4, window_bounds = array<i64: 1, 128>}, {pipeline_mode = #tpu.pipeline_mode<synchronous>, transform_indices = @transform_5, window_bounds = array<i64: 128, 128>}, {pipeline_mode = #tpu.pipeline_mode<synchronous>, transform_indices = @transform_6, window_bounds = array<i64: 1, 128>}, {transform_indices = @transform_7, window_bounds = array<i64: 8, 128>}]} {
    %c0 = arith.constant 0 : index
    %c0_0 = arith.constant 0 : index
    %0 = vector.load %arg1[%c0, %c0_0] : memref<8x16xf32, #tpu.memory_space<vmem>>, vector<8x16xf32>
    %1 = arith.truncf %0 : vector<8x16xf32> to vector<8x16xbf16>
    %c0_1 = arith.constant 0 : index
    %c0_2 = arith.constant 0 : index
    %2 = vector.load %arg2[%c0_1, %c0_2] : memref<16x128xbf16, #tpu.memory_space<vmem>>, vector<16x128xbf16>
    %cst = arith.constant dense<0.000000e+00> : vector<8x128xf32>
    %3 = tpu.matmul %1, %2, %cst {dimension_numbers = #tpu.dot_dimension_numbers<[1], [0], [0], [1], [0, 0, 1, 1], [], []>} : vector<8x16xbf16>, vector<16x128xbf16>, vector<8x128xf32> -> vector<8x128xf32>
    %c0_3 = arith.constant 0 : index
    %c0_4 = arith.constant 0 : index
    %4 = vector.load %arg3[%c0_3, %c0_4] : memref<1x128xf32, #tpu.memory_space<vmem>>, vector<1x128xf32>
    %5 = vector.broadcast %4 : vector<1x128xf32> to vector<8x128xf32>
    %6 = arith.addf %3, %5 : vector<8x128xf32>
    %cst_5 = arith.constant 0.000000e+00 : f32
    %7 = vector.broadcast %cst_5 : f32 to vector<8x128xf32>
    %8 = arith.maximumf %6, %7 : vector<8x128xf32>
    %9 = arith.truncf %8 : vector<8x128xf32> to vector<8x128xbf16>
    %c0_6 = arith.constant 0 : index
    %c0_7 = arith.constant 0 : index
    %10 = vector.load %arg4[%c0_6, %c0_7] : memref<128x128xbf16, #tpu.memory_space<vmem>>, vector<128x128xbf16>
    %cst_8 = arith.constant dense<0.000000e+00> : vector<8x128xf32>
    %11 = tpu.matmul %9, %10, %cst_8 {dimension_numbers = #tpu.dot_dimension_numbers<[1], [0], [0], [1], [0, 0, 1, 1], [], []>} : vector<8x128xbf16>, vector<128x128xbf16>, vector<8x128xf32> -> vector<8x128xf32>
    %c0_9 = arith.constant 0 : index
    %c0_10 = arith.constant 0 : index
    %12 = vector.load %arg5[%c0_9, %c0_10] : memref<1x128xf32, #tpu.memory_space<vmem>>, vector<1x128xf32>
    %13 = vector.broadcast %12 : vector<1x128xf32> to vector<8x128xf32>
    %14 = arith.addf %11, %13 : vector<8x128xf32>
    %cst_11 = arith.constant 0.000000e+00 : f32
    %15 = vector.broadcast %cst_11 : f32 to vector<8x128xf32>
    %16 = arith.maximumf %14, %15 : vector<8x128xf32>
    %17 = arith.truncf %16 : vector<8x128xf32> to vector<8x128xbf16>
    %c0_12 = arith.constant 0 : index
    %c0_13 = arith.constant 0 : index
    %18 = vector.load %arg6[%c0_12, %c0_13] : memref<128x128xbf16, #tpu.memory_space<vmem>>, vector<128x128xbf16>
    %cst_14 = arith.constant dense<0.000000e+00> : vector<8x128xf32>
    %19 = tpu.matmul %17, %18, %cst_14 {dimension_numbers = #tpu.dot_dimension_numbers<[1], [0], [0], [1], [0, 0, 1, 1], [], []>} : vector<8x128xbf16>, vector<128x128xbf16>, vector<8x128xf32> -> vector<8x128xf32>
    %c0_15 = arith.constant 0 : index
    %c0_16 = arith.constant 0 : index
    %20 = vector.load %arg7[%c0_15, %c0_16] : memref<1x128xf32, #tpu.memory_space<vmem>>, vector<1x128xf32>
    %21 = vector.broadcast %20 : vector<1x128xf32> to vector<8x128xf32>
    %22 = arith.addf %19, %21 : vector<8x128xf32>
    %cst_17 = arith.constant 0.000000e+00 : f32
    %23 = vector.broadcast %cst_17 : f32 to vector<8x128xf32>
    %24 = arith.maximumf %22, %23 : vector<8x128xf32>
    %c0_18 = arith.constant 0 : index
    %c0_19 = arith.constant 0 : index
    %25 = vector.load %arg8[%c0_18, %c0_19] : memref<8x128xf32, #tpu.memory_space<vmem>>, vector<8x128xf32>
    tpu.vector_store %arg8[%c0_18, %c0_19], %24 {strides = array<i32>} : memref<8x128xf32, #tpu.memory_space<vmem>>, vector<8x128xf32>,
    return
  }
  func.func @transform_0(%arg0: i32) -> (i32, i32) {
    %c0_i32 = arith.constant 0 : i32
    %c0_i32_0 = arith.constant 0 : i32
    return %arg0, %c0_i32 : i32, i32
  }
  func.func @transform_1(%arg0: i32) -> (i32, i32) {
    %c0_i32 = arith.constant 0 : i32
    %c0_i32_0 = arith.constant 0 : i32
    %c0_i32_1 = arith.constant 0 : i32
    return %c0_i32, %c0_i32_0 : i32, i32
  }
  func.func @transform_2(%arg0: i32) -> (i32, i32) {
    %c0_i32 = arith.constant 0 : i32
    %c0_i32_0 = arith.constant 0 : i32
    %c0_i32_1 = arith.constant 0 : i32
    return %c0_i32, %c0_i32_0 : i32, i32
  }
  func.func @transform_3(%arg0: i32) -> (i32, i32) {
    %c0_i32 = arith.constant 0 : i32
    %c0_i32_0 = arith.constant 0 : i32
    %c0_i32_1 = arith.constant 0 : i32
    return %c0_i32, %c0_i32_0 : i32, i32
  }
  func.func @transform_4(%arg0: i32) -> (i32, i32) {
    %c0_i32 = arith.constant 0 : i32
    %c0_i32_0 = arith.constant 0 : i32
    %c0_i32_1 = arith.constant 0 : i32
    return %c0_i32, %c0_i32_0 : i32, i32
  }
  func.func @transform_5(%arg0: i32) -> (i32, i32) {
    %c0_i32 = arith.constant 0 : i32
    %c0_i32_0 = arith.constant 0 : i32
    %c0_i32_1 = arith.constant 0 : i32
    return %c0_i32, %c0_i32_0 : i32, i32
  }
  func.func @transform_6(%arg0: i32) -> (i32, i32) {
    %c0_i32 = arith.constant 0 : i32
    %c0_i32_0 = arith.constant 0 : i32
    %c0_i32_1 = arith.constant 0 : i32
    return %c0_i32, %c0_i32_0 : i32, i32
  }
  func.func @transform_7(%arg0: i32) -> (i32, i32) {
    %c0_i32 = arith.constant 0 : i32
    %c0_i32_0 = arith.constant 0 : i32
    return %arg0, %c0_i32 : i32, i32
  }
}

</mosaic_0001>

<llo_original>
// kernel: mlp_forward.1
$region0: #{mlp_forward.1}
  #allocation0 [shape = 'u32[]', space=smem, size = 0x4, offset = 0x4, fixed_abs, tag = 'smem constant byte address 0x4 - core index']
  #allocation1 [shape = 'u32[144,128]{1,0:T(1,128)}', space=vmem, size = 0x12000, scoped, tag = 'internal scratch']
  %s0 = inlined_call_operand.vmem [shape: f32[8,16], index: 0, kind: input, shape index: {}]
  %s1 = inlined_call_operand.vmem [shape: bf16[16,128], index: 1, kind: input, shape index: {}]
  %s2 = inlined_call_operand.vmem [shape: f32[1,128], index: 2, kind: input, shape index: {}]
  %s3 = inlined_call_operand.hbm [shape: bf16[128,128], index: 3, kind: input, shape index: {}]
  %s4 = inlined_call_operand.vmem [shape: f32[1,128], index: 4, kind: input, shape index: {}]
  %s5 = inlined_call_operand.hbm [shape: bf16[128,128], index: 5, kind: input, shape index: {}]
  %s6 = inlined_call_operand.vmem [shape: f32[1,128], index: 6, kind: input, shape index: {}]
  %s7 = inlined_call_operand.vmem [shape: f32[8,128], index: 7, kind: output, shape index: {}]
  %s8 = sld [smem:[#allocation0]]
  $region46: #{mlp_forward.1} parent=0
    _
  %s10 = ssub.s32 1, %s8
  %s11 = scalar_select 0, %s10, %s8
  $region1: #{mlp_forward.1} parent=0
    #allocation2 [shape = 'u8[32768]{0}', space=vmem, size = 0x8000, scoped, tag = 'input window, operand 3, single buffered']
    #allocation3 [shape = 's32[1]{0}', space=sflag, size = 0x4, scoped, tag = 'scoped memory for mlp_forward.1']
    #allocation4 [shape = 'u8[32768]{0}', space=vmem, size = 0x8000, scoped, tag = 'input window, operand 5, single buffered']
    #allocation5 [shape = 's32[1]{0}', space=sflag, size = 0x4, scoped, tag = 'scoped memory for mlp_forward.1']
    %12 = vsyncpa [#allocation3], 0
    %13 = vsyncpa [#allocation5], 0
    // Predicated region
    $region2: #{mlp_forward.1} parent=1 // pred_check
      _
    $region3: #{mlp_forward.1} parent=1 // pred_check_branch
      %15 = sbr.rel (0) target = $region5
    $region4: #{mlp_forward.1} parent=1 // pred_region
      _
    $region5: #{mlp_forward.1} parent=1 // pred_fallthru
      _
    // Predicated region
    $region6: #{mlp_forward.1} parent=1 // pred_check
      _
    $region7: #{mlp_forward.1} parent=1 // pred_check_branch
      %17 = sbr.rel (0) target = $region9
    $region8: #{mlp_forward.1} parent=1 // pred_region
      _
    $region9: #{mlp_forward.1} parent=1 // pred_fallthru
      _
    // Predicated region
    $region10: #{mlp_forward.1} parent=1 // pred_check
      _
    $region11: #{mlp_forward.1} parent=1 // pred_check_branch
      %19 = sbr.rel (0) target = $region13
    $region12: #{mlp_forward.1} parent=1 // pred_region
      _
    $region13: #{mlp_forward.1} parent=1 // pred_fallthru
      _
    // Predicated region
    $region14: #{mlp_forward.1} parent=1 // pred_check
      _
    $region15: #{mlp_forward.1} parent=1 // pred_check_branch
      %21 = sbr.rel (0) target = $region17
    $region16: #{mlp_forward.1} parent=1 // pred_region
      %s23 = ssub.s32 1024, 1024
      %24 = vsyncadd [#allocation3], %s23
      %s25 = sshll.u32 [#allocation2], 4
      %s26 = int_to_ptr.vmem [resolvable:$true] %s25
      %31 = dma.hbm_to_vmem [thread:$0]  %s3, 1024, %s26, [#allocation3], 64, 64, 4
    $region17: #{mlp_forward.1} parent=1 // pred_fallthru
      _
    // Predicated region
    $region18: #{mlp_forward.1} parent=1 // pred_check
      _
    $region19: #{mlp_forward.1} parent=1 // pred_check_branch
      %33 = sbr.rel (0) target = $region21
    $region20: #{mlp_forward.1} parent=1 // pred_region
      _
    $region21: #{mlp_forward.1} parent=1 // pred_fallthru
      _
    // Predicated region
    $region22: #{mlp_forward.1} parent=1 // pred_check
      _
    $region23: #{mlp_forward.1} parent=1 // pred_check_branch
      %35 = sbr.rel (0) target = $region25
    $region24: #{mlp_forward.1} parent=1 // pred_region
      %s37 = ssub.s32 1024, 1024
      %38 = vsyncadd [#allocation5], %s37
      %s39 = sshll.u32 [#allocation4], 4
      %s40 = int_to_ptr.vmem [resolvable:$true] %s39
      %45 = dma.hbm_to_vmem [thread:$0]  %s5, 1024, %s40, [#allocation5], 64, 64, 4
    $region25: #{mlp_forward.1} parent=1 // pred_fallthru
      _
    // Predicated region
    $region26: #{mlp_forward.1} parent=1 // pred_check
      _
    $region27: #{mlp_forward.1} parent=1 // pred_check_branch
      %47 = sbr.rel (0) target = $region29
    $region28: #{mlp_forward.1} parent=1 // pred_region
      _
    $region29: #{mlp_forward.1} parent=1 // pred_fallthru
      _
    // Predicated region
    $region30: #{mlp_forward.1} parent=1 // pred_check
      _
    $region31: #{mlp_forward.1} parent=1 // pred_check_branch
      %49 = sbr.rel (0) target = $region33
    $region32: #{mlp_forward.1} parent=1 // pred_region
      %50 = dma.done [#allocation3], 1024
    $region33: #{mlp_forward.1} parent=1 // pred_fallthru
      _
    // Predicated region
    $region34: #{mlp_forward.1} parent=1 // pred_check
      _
    $region35: #{mlp_forward.1} parent=1 // pred_check_branch
      %52 = sbr.rel (0) target = $region37
    $region36: #{mlp_forward.1} parent=1 // pred_region
      %53 = dma.done [#allocation5], 1024
    $region37: #{mlp_forward.1} parent=1 // pred_fallthru
      _
    %v55 = vld [vmem:[%s0] sm:$0xff]
    %v56 = vpack.c.bf16 %v55, %v55
    %v57 = vld [vmem:[%s1] sm:$0xf]
    %v58 = vld [vmem:[%s1 + $0x4] sm:$0xf]
    %v59 = vld [vmem:[%s2] sm:$0x1]
    %v61 = vlaneseq
    %v62 = vshrl.u32 %v61, 7
    %v63 = vsub.s32 0, %v62
    %v64 = vrot.slane %v59, %v63
    %v68 = vunpack.c.l.b16 %v57
    %v69 = vunpack.c.l.b16 %v58
    %v70 = vpack.c.b16 %v69, %v68
    %vm72 = vcmask 130048
    %v74 = vsel %vm72, %v56, 0
    %76 = vmatprep.subr.bf16.mxu0 0
    %77 = vmatpush1.bf16.msra.mxu0 0
    %78 = vmatprep.subr.bf16.mxu0 0
    %79 = vmatpush1.bf16.msra.mxu0 0
    %80 = vmatprep.subr.bf16.mxu0 0
    %81 = vmatpush1.bf16.msra.mxu0 0
    %82 = vmatprep.subr.bf16.mxu0 0
    %83 = vmatpush1.bf16.msra.mxu0 0
    %84 = vmatprep.subr.bf16.mxu0 0
    %85 = vmatpush1.bf16.msra.mxu0 0
    %86 = vmatprep.subr.bf16.mxu0 0
    %87 = vmatpush1.bf16.msra.mxu0 0
    %88 = vmatprep.subr.bf16.mxu0 0
    %89 = vmatpush1.bf16.msra.mxu0 0
    %90 = vmatprep.subr.bf16.mxu0 0
    %91 = vmatpush1.bf16.msra.mxu0 %v70
    %92 = vmatprep.subr.bf16.mxu0 0
    %93 = vmatpush2.bf16.msra.mxu0 0
    %94 = vmatprep.subr.bf16.mxu0 0
    %95 = vmatpush2.bf16.msra.mxu0 0
    %96 = vmatprep.subr.bf16.mxu0 0
    %97 = vmatpush2.bf16.msra.mxu0 0
    %98 = vmatprep.subr.bf16.mxu0 0
    %99 = vmatpush2.bf16.msra.mxu0 0
    %100 = vmatprep.subr.bf16.mxu0 0
    %101 = vmatpush2.bf16.msra.mxu0 0
    %102 = vmatprep.subr.bf16.mxu0 0
    %103 = vmatpush2.bf16.msra.mxu0 0
    %104 = vmatprep.subr.bf16.mxu0 0
    %105 = vmatpush2.bf16.msra.mxu0 0
    %106 = vmatprep.subr.bf16.mxu0 0
    %107 = vmatpush2.bf16.msra.mxu0 0
    %108 = vmatprep.mubr.bf16.mxu0 0
    %109 = vmatmul.mubr.bf16.gmra.mxu0 %v74
    %v110 = vpop.f32.mrf.mxu0
    %v111 = vadd.f32 %v64, %v110
    %v112 = vpop.f32.mrf.mxu0
    %v113 = vpop.f32.mrf.mxu0
    %v114 = vpop.f32.mrf.mxu0
    %115 = vdwg.mxu0
    %v116 = vmax.f32 %v111, 0.0
    %v117 = vpack.c.bf16 %v116, %v116
    %v118 = vld [vmem:[#allocation2] sm:$0xf]
    %v119 = vld [vmem:[#allocation2 + $0x4] sm:$0xf]
    %v120 = vld [vmem:[#allocation2 + $0x8] sm:$0xf]
    %v121 = vld [vmem:[#allocation2 + $0xc] sm:$0xf]
    %v122 = vld [vmem:[#allocation2 + $0x10] sm:$0xf]
    %v123 = vld [vmem:[#allocation2 + $0x14] sm:$0xf]
    %v124 = vld [vmem:[#allocation2 + $0x18] sm:$0xf]
    %v125 = vld [vmem:[#allocation2 + $0x1c] sm:$0xf]
    %v126 = vld [vmem:[#allocation2 + $0x20] sm:$0xf]
    %v127 = vld [vmem:[#allocation2 + $0x24] sm:$0xf]
    %v128 = vld [vmem:[#allocation2 + $0x28] sm:$0xf]
    %v129 = vld [vmem:[#allocation2 + $0x2c] sm:$0xf]
    %v130 = vld [vmem:[#allocation2 + $0x30] sm:$0xf]
    %v131 = vld [vmem:[#allocation2 + $0x34] sm:$0xf]
    %v132 = vld [vmem:[#allocation2 + $0x38] sm:$0xf]
    %v133 = vld [vmem:[#allocation2 + $0x3c] sm:$0xf]
    %v134 = vld [vmem:[%s4] sm:$0x1]
    %v136 = vlaneseq
    %v137 = vshrl.u32 %v136, 7
    %v138 = vsub.s32 0, %v137
    %v139 = vrot.slane %v134, %v138
    %v157 = vunpack.c.l.b16 %v118
    %v158 = vunpack.c.l.b16 %v119
    %v159 = vunpack.c.l.b16 %v120
    %v160 = vunpack.c.l.b16 %v121
    %v161 = vunpack.c.l.b16 %v122
    %v162 = vunpack.c.l.b16 %v123
    %v163 = vunpack.c.l.b16 %v124
    %v164 = vunpack.c.l.b16 %v125
    %v165 = vunpack.c.l.b16 %v126
    %v166 = vunpack.c.l.b16 %v127
    %v167 = vunpack.c.l.b16 %v128
    %v168 = vunpack.c.l.b16 %v129
    %v169 = vunpack.c.l.b16 %v130
    %v170 = vunpack.c.l.b16 %v131
    %v171 = vunpack.c.l.b16 %v132
    %v172 = vunpack.c.l.b16 %v133
    %v173 = vpack.c.b16 %v158, %v157
    %v174 = vpack.c.b16 %v160, %v159
    %v175 = vpack.c.b16 %v162, %v161
    %v176 = vpack.c.b16 %v164, %v163
    %v177 = vpack.c.b16 %v166, %v165
    %v178 = vpack.c.b16 %v168, %v167
    %v179 = vpack.c.b16 %v170, %v169
    %v180 = vpack.c.b16 %v172, %v171
    %189 = vmatprep.subr.bf16.mxu0 0
    %190 = vmatpush1.bf16.msra.mxu0 %v180
    %191 = vmatprep.subr.bf16.mxu0 0
    %192 = vmatpush1.bf16.msra.mxu0 %v179
    %193 = vmatprep.subr.bf16.mxu0 0
    %194 = vmatpush1.bf16.msra.mxu0 %v178
    %195 = vmatprep.subr.bf16.mxu0 0
    %196 = vmatpush1.bf16.msra.mxu0 %v177
    %197 = vmatprep.subr.bf16.mxu0 0
    %198 = vmatpush1.bf16.msra.mxu0 %v176
    %199 = vmatprep.subr.bf16.mxu0 0
    %200 = vmatpush1.bf16.msra.mxu0 %v175
    %201 = vmatprep.subr.bf16.mxu0 0
    %202 = vmatpush1.bf16.msra.mxu0 %v174
    %203 = vmatprep.subr.bf16.mxu0 0
    %204 = vmatpush1.bf16.msra.mxu0 %v173
    %205 = vmatprep.subr.bf16.mxu0 0
    %206 = vmatpush2.bf16.msra.mxu0 0
    %207 = vmatprep.subr.bf16.mxu0 0
    %208 = vmatpush2.bf16.msra.mxu0 0
    %209 = vmatprep.subr.bf16.mxu0 0
    %210 = vmatpush2.bf16.msra.mxu0 0
    %211 = vmatprep.subr.bf16.mxu0 0
    %212 = vmatpush2.bf16.msra.mxu0 0
    %213 = vmatprep.subr.bf16.mxu0 0
    %214 = vmatpush2.bf16.msra.mxu0 0
    %215 = vmatprep.subr.bf16.mxu0 0
    %216 = vmatpush2.bf16.msra.mxu0 0
    %217 = vmatprep.subr.bf16.mxu0 0
    %218 = vmatpush2.bf16.msra.mxu0 0
    %219 = vmatprep.subr.bf16.mxu0 0
    %220 = vmatpush2.bf16.msra.mxu0 0
    %221 = vmatprep.mubr.bf16.mxu0 0
    %222 = vmatmul.mubr.bf16.gmra.mxu0 %v117
    %v223 = vpop.f32.mrf.mxu0
    %v224 = vadd.f32 %v139, %v223
    %v225 = vpop.f32.mrf.mxu0
    %v226 = vpop.f32.mrf.mxu0
    %v227 = vpop.f32.mrf.mxu0
    %228 = vdwg.mxu0
    %v229 = vmax.f32 %v224, 0.0
    %v230 = vpack.c.bf16 %v229, %v229
    %v231 = vld [vmem:[#allocation4] sm:$0xf]
    %v232 = vld [vmem:[#allocation4 + $0x4] sm:$0xf]
    %v233 = vld [vmem:[#allocation4 + $0x8] sm:$0xf]
    %v234 = vld [vmem:[#allocation4 + $0xc] sm:$0xf]
    %v235 = vld [vmem:[#allocation4 + $0x10] sm:$0xf]
    %v236 = vld [vmem:[#allocation4 + $0x14] sm:$0xf]
    %v237 = vld [vmem:[#allocation4 + $0x18] sm:$0xf]
    %v238 = vld [vmem:[#allocation4 + $0x1c] sm:$0xf]
    %v239 = vld [vmem:[#allocation4 + $0x20] sm:$0xf]
    %v240 = vld [vmem:[#allocation4 + $0x24] sm:$0xf]
    %v241 = vld [vmem:[#allocation4 + $0x28] sm:$0xf]
    %v242 = vld [vmem:[#allocation4 + $0x2c] sm:$0xf]
    %v243 = vld [vmem:[#allocation4 + $0x30] sm:$0xf]
    %v244 = vld [vmem:[#allocation4 + $0x34] sm:$0xf]
    %v245 = vld [vmem:[#allocation4 + $0x38] sm:$0xf]
    %v246 = vld [vmem:[#allocation4 + $0x3c] sm:$0xf]
    %v247 = vld [vmem:[%s6] sm:$0x1]
    %v249 = vlaneseq
    %v250 = vshrl.u32 %v249, 7
    %v251 = vsub.s32 0, %v250
    %v252 = vrot.slane %v247, %v251
    %v270 = vunpack.c.l.b16 %v231
    %v271 = vunpack.c.l.b16 %v232
    %v272 = vunpack.c.l.b16 %v233
    %v273 = vunpack.c.l.b16 %v234
    %v274 = vunpack.c.l.b16 %v235
    %v275 = vunpack.c.l.b16 %v236
    %v276 = vunpack.c.l.b16 %v237
    %v277 = vunpack.c.l.b16 %v238
    %v278 = vunpack.c.l.b16 %v239
    %v279 = vunpack.c.l.b16 %v240
    %v280 = vunpack.c.l.b16 %v241
    %v281 = vunpack.c.l.b16 %v242
    %v282 = vunpack.c.l.b16 %v243
    %v283 = vunpack.c.l.b16 %v244
    %v284 = vunpack.c.l.b16 %v245
    %v285 = vunpack.c.l.b16 %v246
    %v286 = vpack.c.b16 %v271, %v270
    %v287 = vpack.c.b16 %v273, %v272
    %v288 = vpack.c.b16 %v275, %v274
    %v289 = vpack.c.b16 %v277, %v276
    %v290 = vpack.c.b16 %v279, %v278
    %v291 = vpack.c.b16 %v281, %v280
    %v292 = vpack.c.b16 %v283, %v282
    %v293 = vpack.c.b16 %v285, %v284
    %302 = vmatprep.subr.bf16.mxu0 0
    %303 = vmatpush1.bf16.msra.mxu0 %v293
    %304 = vmatprep.subr.bf16.mxu0 0
    %305 = vmatpush1.bf16.msra.mxu0 %v292
    %306 = vmatprep.subr.bf16.mxu0 0
    %307 = vmatpush1.bf16.msra.mxu0 %v291
    %308 = vmatprep.subr.bf16.mxu0 0
    %309 = vmatpush1.bf16.msra.mxu0 %v290
    %310 = vmatprep.subr.bf16.mxu0 0
    %311 = vmatpush1.bf16.msra.mxu0 %v289
    %312 = vmatprep.subr.bf16.mxu0 0
    %313 = vmatpush1.bf16.msra.mxu0 %v288
    %314 = vmatprep.subr.bf16.mxu0 0
    %315 = vmatpush1.bf16.msra.mxu0 %v287
    %316 = vmatprep.subr.bf16.mxu0 0
    %317 = vmatpush1.bf16.msra.mxu0 %v286
    %318 = vmatprep.subr.bf16.mxu0 0
    %319 = vmatpush2.bf16.msra.mxu0 0
    %320 = vmatprep.subr.bf16.mxu0 0
    %321 = vmatpush2.bf16.msra.mxu0 0
    %322 = vmatprep.subr.bf16.mxu0 0
    %323 = vmatpush2.bf16.msra.mxu0 0
    %324 = vmatprep.subr.bf16.mxu0 0
    %325 = vmatpush2.bf16.msra.mxu0 0
    %326 = vmatprep.subr.bf16.mxu0 0
    %327 = vmatpush2.bf16.msra.mxu0 0
    %328 = vmatprep.subr.bf16.mxu0 0
    %329 = vmatpush2.bf16.msra.mxu0 0
    %330 = vmatprep.subr.bf16.mxu0 0
    %331 = vmatpush2.bf16.msra.mxu0 0
    %332 = vmatprep.subr.bf16.mxu0 0
    %333 = vmatpush2.bf16.msra.mxu0 0
    %334 = vmatprep.mubr.bf16.mxu0 0
    %335 = vmatmul.mubr.bf16.gmra.mxu0 %v230
    %v336 = vpop.f32.mrf.mxu0
    %v337 = vadd.f32 %v252, %v336
    %v338 = vpop.f32.mrf.mxu0
    %v339 = vpop.f32.mrf.mxu0
    %v340 = vpop.f32.mrf.mxu0
    %341 = vdwg.mxu0
    %v342 = vmax.f32 %v337, 0.0
    %343 = vst [vmem:[%s7] sm:$0xff] %v342
    // Predicated region
    $region38: #{mlp_forward.1} parent=1 // pred_check
      _
    $region39: #{mlp_forward.1} parent=1 // pred_check_branch
      %345 = sbr.rel (0) target = $region41
    $region40: #{mlp_forward.1} parent=1 // pred_region
      _
    $region41: #{mlp_forward.1} parent=1 // pred_fallthru
      _
    // Predicated region
    $region42: #{mlp_forward.1} parent=1 // pred_check
      _
    $region43: #{mlp_forward.1} parent=1 // pred_check_branch
      %347 = sbr.rel (0) target = $region45
    $region44: #{mlp_forward.1} parent=1 // pred_region
      _
    $region45: #{mlp_forward.1} parent=1 // pred_fallthru
      _
    %348 = vsyncpa [#allocation3], 1
    %349 = vsyncpa [#allocation5], 1

// kernel: mlp_forward.1
$region0: #{mlp_forward.1}
  #allocation0 [shape = 'u32[]', space=smem, size = 0x4, offset = 0x4, fixed_abs, tag = 'smem constant byte address 0x4 - core index']
  #allocation1 [shape = 'u32[144,128]{1,0:T(1,128)}', space=vmem, size = 0x12000, scoped, tag = 'internal scratch']
  %s0 = inlined_call_operand.vmem [shape: f32[8,16], index: 0, kind: input, shape index: {}]
  %s1 = inlined_call_operand.vmem [shape: bf16[16,128], index: 1, kind: input, shape index: {}]
  %s2 = inlined_call_operand.vmem [shape: f32[1,128], index: 2, kind: input, shape index: {}]
  %s3 = inlined_call_operand.hbm [shape: bf16[128,128], index: 3, kind: input, shape index: {}]
  %s4 = inlined_call_operand.vmem [shape: f32[1,128], index: 4, kind: input, shape index: {}]
  %s5 = inlined_call_operand.hbm [shape: bf16[128,128], index: 5, kind: input, shape index: {}]
  %s6 = inlined_call_operand.vmem [shape: f32[1,128], index: 6, kind: input, shape index: {}]
  %s7 = inlined_call_operand.vmem [shape: f32[8,128], index: 7, kind: output, shape index: {}]
  %s8 = sld [smem:[#allocation0]]
  $region46: #{mlp_forward.1} parent=0
    _
  %s10 = ssub.s32 1, %s8
  %s11 = scalar_select 0, %s10, %s8
  $region1: #{mlp_forward.1} parent=0
    #allocation2 [shape = 'u8[32768]{0}', space=vmem, size = 0x8000, scoped, tag = 'input window, operand 3, single buffered']
    #allocation3 [shape = 's32[1]{0}', space=sflag, size = 0x4, scoped, tag = 'scoped memory for mlp_forward.1']
    #allocation4 [shape = 'u8[32768]{0}', space=vmem, size = 0x8000, scoped, tag = 'input window, operand 5, single buffered']
    #allocation5 [shape = 's32[1]{0}', space=sflag, size = 0x4, scoped, tag = 'scoped memory for mlp_forward.1']
    %12 = vsyncpa [#allocation3], 0
    %13 = vsyncpa [#allocation5], 0
    // Predicated region
    $region2: #{mlp_forward.1} parent=1 // pred_check
      _
    $region3: #{mlp_forward.1} parent=1 // pred_check_branch
      %15 = sbr.rel (0) target = $region5
    $region4: #{mlp_forward.1} parent=1 // pred_region
      _
    $region5: #{mlp_forward.1} parent=1 // pred_fallthru
      _
    // Predicated region
    $region6: #{mlp_forward.1} parent=1 // pred_check
      _
    $region7: #{mlp_forward.1} parent=1 // pred_check_branch
      %17 = sbr.rel (0) target = $region9
    $region8: #{mlp_forward.1} parent=1 // pred_region
      _
    $region9: #{mlp_forward.1} parent=1 // pred_fallthru
      _
    // Predicated region
    $region10: #{mlp_forward.1} parent=1 // pred_check
      _
    $region11: #{mlp_forward.1} parent=1 // pred_check_branch
      %19 = sbr.rel (0) target = $region13
    $region12: #{mlp_forward.1} parent=1 // pred_region
      _
    $region13: #{mlp_forward.1} parent=1 // pred_fallthru
      _
    // Predicated region
    $region14: #{mlp_forward.1} parent=1 // pred_check
      _
    $region15: #{mlp_forward.1} parent=1 // pred_check_branch
      %21 = sbr.rel (0) target = $region17
    $region16: #{mlp_forward.1} parent=1 // pred_region
      %s23 = ssub.s32 1024, 1024
      %24 = vsyncadd [#allocation3], %s23
      %s25 = sshll.u32 [#allocation2], 4
      %s26 = int_to_ptr.vmem [resolvable:$true] %s25
      %31 = dma.hbm_to_vmem [thread:$0]  %s3, 1024, %s26, [#allocation3], 64, 64, 4
    $region17: #{mlp_forward.1} parent=1 // pred_fallthru
      _
    // Predicated region
    $region18: #{mlp_forward.1} parent=1 // pred_check
      _
    $region19: #{mlp_forward.1} parent=1 // pred_check_branch
      %33 = sbr.rel (0) target = $region21
    $region20: #{mlp_forward.1} parent=1 // pred_region
      _
    $region21: #{mlp_forward.1} parent=1 // pred_fallthru
      _
    // Predicated region
    $region22: #{mlp_forward.1} parent=1 // pred_check
      _
    $region23: #{mlp_forward.1} parent=1 // pred_check_branch
      %35 = sbr.rel (0) target = $region25
    $region24: #{mlp_forward.1} parent=1 // pred_region
      %s37 = ssub.s32 1024, 1024
      %38 = vsyncadd [#allocation5], %s37
      %s39 = sshll.u32 [#allocation4], 4
      %s40 = int_to_ptr.vmem [resolvable:$true] %s39
      %45 = dma.hbm_to_vmem [thread:$0]  %s5, 1024, %s40, [#allocation5], 64, 64, 4
    $region25: #{mlp_forward.1} parent=1 // pred_fallthru
      _
    // Predicated region
    $region26: #{mlp_forward.1} parent=1 // pred_check
      _
    $region27: #{mlp_forward.1} parent=1 // pred_check_branch
      %47 = sbr.rel (0) target = $region29
    $region28: #{mlp_forward.1} parent=1 // pred_region
      _
    $region29: #{mlp_forward.1} parent=1 // pred_fallthru
      _
    // Predicated region
    $region30: #{mlp_forward.1} parent=1 // pred_check
      _
    $region31: #{mlp_forward.1} parent=1 // pred_check_branch
      %49 = sbr.rel (0) target = $region33
    $region32: #{mlp_forward.1} parent=1 // pred_region
      %50 = dma.done [#allocation3], 1024
    $region33: #{mlp_forward.1} parent=1 // pred_fallthru
      _
    // Predicated region
    $region34: #{mlp_forward.1} parent=1 // pred_check
      _
    $region35: #{mlp_forward.1} parent=1 // pred_check_branch
      %52 = sbr.rel (0) target = $region37
    $region36: #{mlp_forward.1} parent=1 // pred_region
      %53 = dma.done [#allocation5], 1024
    $region37: #{mlp_forward.1} parent=1 // pred_fallthru
      _
    %v55 = vld [vmem:[%s0] sm:$0xff]
    %v56 = vpack.c.bf16 %v55, %v55
    %v57 = vld [vmem:[%s1] sm:$0xf]
    %v58 = vld [vmem:[%s1 + $0x4] sm:$0xf]
    %v59 = vld [vmem:[%s2] sm:$0x1]
    %v61 = vlaneseq
    %v62 = vshrl.u32 %v61, 7
    %v63 = vsub.s32 0, %v62
    %v64 = vrot.slane %v59, %v63
    %v68 = vunpack.c.l.b16 %v57
    %v69 = vunpack.c.l.b16 %v58
    %v70 = vpack.c.b16 %v69, %v68
    %vm72 = vcmask 130048
    %v74 = vsel %vm72, %v56, 0
    %76 = vmatprep.subr.bf16.mxu0 0
    %77 = vmatpush1.bf16.msra.mxu0 0
    %78 = vmatprep.subr.bf16.mxu0 0
    %79 = vmatpush1.bf16.msra.mxu0 0
    %80 = vmatprep.subr.bf16.mxu0 0
    %81 = vmatpush1.bf16.msra.mxu0 0
    %82 = vmatprep.subr.bf16.mxu0 0
    %83 = vmatpush1.bf16.msra.mxu0 0
    %84 = vmatprep.subr.bf16.mxu0 0
    %85 = vmatpush1.bf16.msra.mxu0 0
    %86 = vmatprep.subr.bf16.mxu0 0
    %87 = vmatpush1.bf16.msra.mxu0 0
    %88 = vmatprep.subr.bf16.mxu0 0
    %89 = vmatpush1.bf16.msra.mxu0 0
    %90 = vmatprep.subr.bf16.mxu0 0
    %91 = vmatpush1.bf16.msra.mxu0 %v70
    %92 = vmatprep.subr.bf16.mxu0 0
    %93 = vmatpush2.bf16.msra.mxu0 0
    %94 = vmatprep.subr.bf16.mxu0 0
    %95 = vmatpush2.bf16.msra.mxu0 0
    %96 = vmatprep.subr.bf16.mxu0 0
    %97 = vmatpush2.bf16.msra.mxu0 0
    %98 = vmatprep.subr.bf16.mxu0 0
    %99 = vmatpush2.bf16.msra.mxu0 0
    %100 = vmatprep.subr.bf16.mxu0 0
    %101 = vmatpush2.bf16.msra.mxu0 0
    %102 = vmatprep.subr.bf16.mxu0 0
    %103 = vmatpush2.bf16.msra.mxu0 0
    %104 = vmatprep.subr.bf16.mxu0 0
    %105 = vmatpush2.bf16.msra.mxu0 0
    %106 = vmatprep.subr.bf16.mxu0 0
    %107 = vmatpush2.bf16.msra.mxu0 0
    %108 = vmatprep.mubr.bf16.mxu0 0
    %109 = vmatmul.mubr.bf16.gmra.mxu0 %v74
    %v110 = vpop.f32.mrf.mxu0
    %v111 = vadd.f32 %v64, %v110
    %v112 = vpop.f32.mrf.mxu0
    %v113 = vpop.f32.mrf.mxu0
    %v114 = vpop.f32.mrf.mxu0
    %115 = vdwg.mxu0
    %v116 = vmax.f32 %v111, 0.0
    %v117 = vpack.c.bf16 %v116, %v116
    %v118 = vld [vmem:[#allocation2] sm:$0xf]
    %v119 = vld [vmem:[#allocation2 + $0x4] sm:$0xf]
    %v120 = vld [vmem:[#allocation2 + $0x8] sm:$0xf]
    %v121 = vld [vmem:[#allocation2 + $0xc] sm:$0xf]
    %v122 = vld [vmem:[#allocation2 + $0x10] sm:$0xf]
    %v123 = vld [vmem:[#allocation2 + $0x14] sm:$0xf]
    %v124 = vld [vmem:[#allocation2 + $0x18] sm:$0xf]
    %v125 = vld [vmem:[#allocation2 + $0x1c] sm:$0xf]
    %v126 = vld [vmem:[#allocation2 + $0x20] sm:$0xf]
    %v127 = vld [vmem:[#allocation2 + $0x24] sm:$0xf]
    %v128 = vld [vmem:[#allocation2 + $0x28] sm:$0xf]
    %v129 = vld [vmem:[#allocation2 + $0x2c] sm:$0xf]
    %v130 = vld [vmem:[#allocation2 + $0x30] sm:$0xf]
    %v131 = vld [vmem:[#allocation2 + $0x34] sm:$0xf]
    %v132 = vld [vmem:[#allocation2 + $0x38] sm:$0xf]
    %v133 = vld [vmem:[#allocation2 + $0x3c] sm:$0xf]
    %v134 = vld [vmem:[%s4] sm:$0x1]
    %v136 = vlaneseq
    %v137 = vshrl.u32 %v136, 7
    %v138 = vsub.s32 0, %v137
    %v139 = vrot.slane %v134, %v138
    %v157 = vunpack.c.l.b16 %v118
    %v158 = vunpack.c.l.b16 %v119
    %v159 = vunpack.c.l.b16 %v120
    %v160 = vunpack.c.l.b16 %v121
    %v161 = vunpack.c.l.b16 %v122
    %v162 = vunpack.c.l.b16 %v123
    %v163 = vunpack.c.l.b16 %v124
    %v164 = vunpack.c.l.b16 %v125
    %v165 = vunpack.c.l.b16 %v126
    %v166 = vunpack.c.l.b16 %v127
    %v167 = vunpack.c.l.b16 %v128
    %v168 = vunpack.c.l.b16 %v129
    %v169 = vunpack.c.l.b16 %v130
    %v170 = vunpack.c.l.b16 %v131
    %v171 = vunpack.c.l.b16 %v132
    %v172 = vunpack.c.l.b16 %v133
    %v173 = vpack.c.b16 %v158, %v157
    %v174 = vpack.c.b16 %v160, %v159
    %v175 = vpack.c.b16 %v162, %v161
    %v176 = vpack.c.b16 %v164, %v163
    %v177 = vpack.c.b16 %v166, %v165
    %v178 = vpack.c.b16 %v168, %v167
    %v179 = vpack.c.b16 %v170, %v169
    %v180 = vpack.c.b16 %v172, %v171
    %189 = vmatprep.subr.bf16.mxu0 0
    %190 = vmatpush1.bf16.msra.mxu0 %v180
    %191 = vmatprep.subr.bf16.mxu0 0
    %192 = vmatpush1.bf16.msra.mxu0 %v179
    %193 = vmatprep.subr.bf16.mxu0 0
    %194 = vmatpush1.bf16.msra.mxu0 %v178
    %195 = vmatprep.subr.bf16.mxu0 0
    %196 = vmatpush1.bf16.msra.mxu0 %v177
    %197 = vmatprep.subr.bf16.mxu0 0
    %198 = vmatpush1.bf16.msra.mxu0 %v176
    %199 = vmatprep.subr.bf16.mxu0 0
    %200 = vmatpush1.bf16.msra.mxu0 %v175
    %201 = vmatprep.subr.bf16.mxu0 0
    %202 = vmatpush1.bf16.msra.mxu0 %v174
    %203 = vmatprep.subr.bf16.mxu0 0
    %204 = vmatpush1.bf16.msra.mxu0 %v173
    %205 = vmatprep.subr.bf16.mxu0 0
    %206 = vmatpush2.bf16.msra.mxu0 0
    %207 = vmatprep.subr.bf16.mxu0 0
    %208 = vmatpush2.bf16.msra.mxu0 0
    %209 = vmatprep.subr.bf16.mxu0 0
    %210 = vmatpush2.bf16.msra.mxu0 0
    %211 = vmatprep.subr.bf16.mxu0 0
    %212 = vmatpush2.bf16.msra.mxu0 0
    %213 = vmatprep.subr.bf16.mxu0 0
    %214 = vmatpush2.bf16.msra.mxu0 0
    %215 = vmatprep.subr.bf16.mxu0 0
    %216 = vmatpush2.bf16.msra.mxu0 0
    %217 = vmatprep.subr.bf16.mxu0 0
    %218 = vmatpush2.bf16.msra.mxu0 0
    %219 = vmatprep.subr.bf16.mxu0 0
    %220 = vmatpush2.bf16.msra.mxu0 0
    %221 = vmatprep.mubr.bf16.mxu0 0
    %222 = vmatmul.mubr.bf16.gmra.mxu0 %v117
    %v223 = vpop.f32.mrf.mxu0
    %v224 = vadd.f32 %v139, %v223
    %v225 = vpop.f32.mrf.mxu0
    %v226 = vpop.f32.mrf.mxu0
    %v227 = vpop.f32.mrf.mxu0
    %228 = vdwg.mxu0
    %v229 = vmax.f32 %v224, 0.0
    %v230 = vpack.c.bf16 %v229, %v229
    %v231 = vld [vmem:[#allocation4] sm:$0xf]
    %v232 = vld [vmem:[#allocation4 + $0x4] sm:$0xf]
    %v233 = vld [vmem:[#allocation4 + $0x8] sm:$0xf]
    %v234 = vld [vmem:[#allocation4 + $0xc] sm:$0xf]
    %v235 = vld [vmem:[#allocation4 + $0x10] sm:$0xf]
    %v236 = vld [vmem:[#allocation4 + $0x14] sm:$0xf]
    %v237 = vld [vmem:[#allocation4 + $0x18] sm:$0xf]
    %v238 = vld [vmem:[#allocation4 + $0x1c] sm:$0xf]
    %v239 = vld [vmem:[#allocation4 + $0x20] sm:$0xf]
    %v240 = vld [vmem:[#allocation4 + $0x24] sm:$0xf]
    %v241 = vld [vmem:[#allocation4 + $0x28] sm:$0xf]
    %v242 = vld [vmem:[#allocation4 + $0x2c] sm:$0xf]
    %v243 = vld [vmem:[#allocation4 + $0x30] sm:$0xf]
    %v244 = vld [vmem:[#allocation4 + $0x34] sm:$0xf]
    %v245 = vld [vmem:[#allocation4 + $0x38] sm:$0xf]
    %v246 = vld [vmem:[#allocation4 + $0x3c] sm:$0xf]
    %v247 = vld [vmem:[%s6] sm:$0x1]
    %v249 = vlaneseq
    %v250 = vshrl.u32 %v249, 7
    %v251 = vsub.s32 0, %v250
    %v252 = vrot.slane %v247, %v251
    %v270 = vunpack.c.l.b16 %v231
    %v271 = vunpack.c.l.b16 %v232
    %v272 = vunpack.c.l.b16 %v233
    %v273 = vunpack.c.l.b16 %v234
    %v274 = vunpack.c.l.b16 %v235
    %v275 = vunpack.c.l.b16 %v236
    %v276 = vunpack.c.l.b16 %v237
    %v277 = vunpack.c.l.b16 %v238
    %v278 = vunpack.c.l.b16 %v239
    %v279 = vunpack.c.l.b16 %v240
    %v280 = vunpack.c.l.b16 %v241
    %v281 = vunpack.c.l.b16 %v242
    %v282 = vunpack.c.l.b16 %v243
    %v283 = vunpack.c.l.b16 %v244
    %v284 = vunpack.c.l.b16 %v245
    %v285 = vunpack.c.l.b16 %v246
    %v286 = vpack.c.b16 %v271, %v270
    %v287 = vpack.c.b16 %v273, %v272
    %v288 = vpack.c.b16 %v275, %v274
    %v289 = vpack.c.b16 %v277, %v276
    %v290 = vpack.c.b16 %v279, %v278
    %v291 = vpack.c.b16 %v281, %v280
    %v292 = vpack.c.b16 %v283, %v282
    %v293 = vpack.c.b16 %v285, %v284
    %302 = vmatprep.subr.bf16.mxu0 0
    %303 = vmatpush1.bf16.msra.mxu0 %v293
    %304 = vmatprep.subr.bf16.mxu0 0
    %305 = vmatpush1.bf16.msra.mxu0 %v292
    %306 = vmatprep.subr.bf16.mxu0 0
    %307 = vmatpush1.bf16.msra.mxu0 %v291
    %308 = vmatprep.subr.bf16.mxu0 0
    %309 = vmatpush1.bf16.msra.mxu0 %v290
    %310 = vmatprep.subr.bf16.mxu0 0
    %311 = vmatpush1.bf16.msra.mxu0 %v289
    %312 = vmatprep.subr.bf16.mxu0 0
    %313 = vmatpush1.bf16.msra.mxu0 %v288
    %314 = vmatprep.subr.bf16.mxu0 0
    %315 = vmatpush1.bf16.msra.mxu0 %v287
    %316 = vmatprep.subr.bf16.mxu0 0
    %317 = vmatpush1.bf16.msra.mxu0 %v286
    %318 = vmatprep.subr.bf16.mxu0 0
    %319 = vmatpush2.bf16.msra.mxu0 0
    %320 = vmatprep.subr.bf16.mxu0 0
    %321 = vmatpush2.bf16.msra.mxu0 0
    %322 = vmatprep.subr.bf16.mxu0 0
    %323 = vmatpush2.bf16.msra.mxu0 0
    %324 = vmatprep.subr.bf16.mxu0 0
    %325 = vmatpush2.bf16.msra.mxu0 0
    %326 = vmatprep.subr.bf16.mxu0 0
    %327 = vmatpush2.bf16.msra.mxu0 0
    %328 = vmatprep.subr.bf16.mxu0 0
    %329 = vmatpush2.bf16.msra.mxu0 0
    %330 = vmatprep.subr.bf16.mxu0 0
    %331 = vmatpush2.bf16.msra.mxu0 0
    %332 = vmatprep.subr.bf16.mxu0 0
    %333 = vmatpush2.bf16.msra.mxu0 0
    %334 = vmatprep.mubr.bf16.mxu0 0
    %335 = vmatmul.mubr.bf16.gmra.mxu0 %v230
    %v336 = vpop.f32.mrf.mxu0
    %v337 = vadd.f32 %v252, %v336
    %v338 = vpop.f32.mrf.mxu0
    %v339 = vpop.f32.mrf.mxu0
    %v340 = vpop.f32.mrf.mxu0
    %341 = vdwg.mxu0
    %v342 = vmax.f32 %v337, 0.0
    %343 = vst [vmem:[%s7] sm:$0xff] %v342
    // Predicated region
    $region38: #{mlp_forward.1} parent=1 // pred_check
      _
    $region39: #{mlp_forward.1} parent=1 // pred_check_branch
      %345 = sbr.rel (0) target = $region41
    $region40: #{mlp_forward.1} parent=1 // pred_region
      _
    $region41: #{mlp_forward.1} parent=1 // pred_fallthru
      _
    // Predicated region
    $region42: #{mlp_forward.1} parent=1 // pred_check
      _
    $region43: #{mlp_forward.1} parent=1 // pred_check_branch
      %347 = sbr.rel (0) target = $region45
    $region44: #{mlp_forward.1} parent=1 // pred_region
      _
    $region45: #{mlp_forward.1} parent=1 // pred_fallthru
      _
    %348 = vsyncpa [#allocation3], 1
    %349 = vsyncpa [#allocation5], 1

</llo_original>
